<compile_context>
chip_gen: v6e
topology: v6e:2x2x1
jax: 0.10.0
libtpu: 0.0.40
codegen_flags: <defaults>
</compile_context>

<pallas_src>
import jax
import jax.numpy as jnp
import numpy as np
from jax.experimental import pallas as pl
from jax.experimental.pallas import tpu as pltpu


def _ape_add_kernel(x_ref, pos_ref, o_ref):
    # Blocks: (1, tile_c, tile_n).  Single f32-accumulated, lane-dense add.
    o_ref[...] = (
        x_ref[...].astype(jnp.float32) + pos_ref[...].astype(jnp.float32)
    ).astype(o_ref.dtype)


def _pick_tiles(C, N, itemsize, budget_bytes=4 << 20):
    """Choose (tile_c, tile_n) so one block stays <= budget_bytes.

    Prefers full-N blocks (lane-dense, fewest grid steps) with the largest
    channel tile that is C or a multiple-of-8 divisor of C.  If even tile_c=8
    with full N blows the budget, tiles N in multiples of 128 that divide N.
    """
    c_cands = sorted({C} | {d for d in range(8, C, 8) if C % d == 0}, reverse=True)
    for tc in c_cands:
        if tc * N * itemsize <= budget_bytes:
            return tc, N
    # Fallback: smallest channel tile + tile the last dim (lane-dense tiles).
    tc = c_cands[-1]
    n_cands = sorted({d for d in range(128, N, 128) if N % d == 0}, reverse=True)
    for tn in n_cands:
        if tc * tn * itemsize <= budget_bytes:
            return tc, tn
    # TODO(synk): cdiv-based partial-N tiling for enormous N with no 128-multiple divisor.
    return tc, (n_cands[-1] if n_cands else N)


def absolute_positional_embedding(x_ncthw, emb_t, emb_h, emb_w, scale):
    """x_ncthw: (B, C, T, H, W); emb_*: (max_len, C) embedding tables."""
    B, C, T, H, W = x_ncthw.shape
    N = T * H * W

    # --- tiny precompute in plain JAX (only C*N elements) ---
    # pos[c, t*H*W + h*W + w] = scale * (emb_t[t,c] + emb_h[h,c] + emb_w[w,c])
    pe = (
        emb_t[:T][:, None, None, :]      # (T,1,1,C)
        + emb_h[:H][None, :, None, :]    # (1,H,1,C)
        + emb_w[:W][None, None, :, :]    # (1,1,W,C)
    ) * scale                            # (T,H,W,C)
    # Cast to x.dtype so the pos HBM stream matches x (and VMEM budgeting).
    # Note: output dtype is x.dtype (for low-precision x this differs from strict
    # torch promotion, which would upcast to the f32 table dtype).
    pos = jnp.transpose(pe, (3, 0, 1, 2)).reshape(1, C, N).astype(x_ncthw.dtype)

    # --- lane-dense per-batch view of x (contiguous reshape, free) ---
    x = x_ncthw.reshape(B, C, N)

    tile_c, tile_n = _pick_tiles(C, N, x.dtype.itemsize)
    grid = (C // tile_c, N // tile_n, B)   # batch innermost -> pos DMA reused across b

    out = pl.pallas_call(
        _ape_add_kernel,
        out_shape=jax.ShapeDtypeStruct((B, C, N), x.dtype),
        grid_spec=pltpu.PrefetchScalarGridSpec(
            num_scalar_prefetch=0,
            grid=grid,
            in_specs=[
                pl.BlockSpec((1, tile_c, tile_n), lambda ci, ni, b: (b, ci, ni)),
                pl.BlockSpec((1, tile_c, tile_n), lambda ci, ni, b: (0, ci, ni)),
            ],
            out_specs=pl.BlockSpec((1, tile_c, tile_n), lambda ci, ni, b: (b, ci, ni)),
        ),
        compiler_params=pltpu.CompilerParams(
            dimension_semantics=("parallel", "parallel", "parallel"),
            # 3 streams x 2 buffers x <=4 MiB blocks = <=24 MiB; 32 MiB covers it
            # on every generation (v5e/v6e: 128 MiB physical, v7x: 64 MiB).
            vmem_limit_bytes=32 << 20,
        ),
    )(x, pos)

    return out.reshape(B, C, T, H, W)


def _reference(x_ncthw, emb_t, emb_h, emb_w, scale):
    B, C, T, H, W = x_ncthw.shape
    pe_t = (emb_t[:T].T * scale).reshape(1, C, T, 1, 1)
    pe_h = (emb_h[:H].T * scale).reshape(1, C, 1, H, 1)
    pe_w = (emb_w[:W].T * scale).reshape(1, C, 1, 1, W)
    return x_ncthw + pe_t + pe_h + pe_w


if __name__ == "__main__":
    # Module config (small, consistent with the forward semantics)
    dim = 32
    max_seq_len = (6, 10, 12)          # (max_t, max_h, max_w)
    scale = dim ** (-0.5)

    # Input: (B, C, T, H, W) with T<=max_t, H<=max_h, W<=max_w
    B, C, T, H, W = 2, dim, 4, 8, 8

    key = jax.random.PRNGKey(0)
    kx, kt, kh, kw = jax.random.split(key, 4)

    x = jax.random.normal(kx, (B, C, T, H, W), dtype=jnp.float32)
    emb_t = jax.random.normal(kt, (max_seq_len[0], dim), dtype=jnp.float32)
    emb_h = jax.random.normal(kh, (max_seq_len[1], dim), dtype=jnp.float32)
    emb_w = jax.random.normal(kw, (max_seq_len[2], dim), dtype=jnp.float32)

    out = absolute_positional_embedding(x, emb_t, emb_h, emb_w, scale)
    out = jax.block_until_ready(out)

    ref = _reference(x, emb_t, emb_h, emb_w, scale)
    np.testing.assert_allclose(np.asarray(out), np.asarray(ref), rtol=1e-5, atol=1e-5)

    print("KERNEL_OK")
</pallas_src>

<mosaic_0001>
module attributes {stable_mosaic.version = 11 : i64} {
  func.func @_ape_add_kernel(%arg0: i32, %arg1: i32, %arg2: i32, %arg3: memref<1x32x256xf32, #tpu.memory_space<vmem>>, %arg4: memref<1x32x256xf32, #tpu.memory_space<vmem>>, %arg5: memref<1x32x256xf32, #tpu.memory_space<vmem>>) attributes {dimension_semantics = [#tpu.dimension_semantics<parallel>, #tpu.dimension_semantics<parallel>, #tpu.dimension_semantics<parallel>], iteration_bounds = array<i64: 1, 1, 2>, scalar_prefetch = 0 : i64, scratch_operands = 0 : i64, tpu.core_type = #tpu.core_type<tc>, window_params = [{transform_indices = @transform_0, window_bounds = array<i64: 1, 32, 256>}, {transform_indices = @transform_1, window_bounds = array<i64: 1, 32, 256>}, {transform_indices = @transform_2, window_bounds = array<i64: 1, 32, 256>}]} {
    %c0 = arith.constant 0 : index
    %c0_0 = arith.constant 0 : index
    %c0_1 = arith.constant 0 : index
    %0 = vector.load %arg3[%c0, %c0_0, %c0_1] : memref<1x32x256xf32, #tpu.memory_space<vmem>>, vector<1x32x256xf32>
    %c0_2 = arith.constant 0 : index
    %c0_3 = arith.constant 0 : index
    %c0_4 = arith.constant 0 : index
    %1 = vector.load %arg4[%c0_2, %c0_3, %c0_4] : memref<1x32x256xf32, #tpu.memory_space<vmem>>, vector<1x32x256xf32>
    %2 = arith.addf %0, %1 : vector<1x32x256xf32>
    %c0_5 = arith.constant 0 : index
    %c0_6 = arith.constant 0 : index
    %c0_7 = arith.constant 0 : index
    %3 = vector.load %arg5[%c0_5, %c0_6, %c0_7] : memref<1x32x256xf32, #tpu.memory_space<vmem>>, vector<1x32x256xf32>
    tpu.vector_store %arg5[%c0_5, %c0_6, %c0_7], %2 {strides = array<i32>} : memref<1x32x256xf32, #tpu.memory_space<vmem>>, vector<1x32x256xf32>,
    return
  }
  func.func @transform_0(%arg0: i32, %arg1: i32, %arg2: i32) -> (i32, i32, i32) {
    %c0_i32 = arith.constant 0 : i32
    return %arg2, %arg0, %arg1 : i32, i32, i32
  }
  func.func @transform_1(%arg0: i32, %arg1: i32, %arg2: i32) -> (i32, i32, i32) {
    %c0_i32 = arith.constant 0 : i32
    %c0_i32_0 = arith.constant 0 : i32
    return %c0_i32, %arg0, %arg1 : i32, i32, i32
  }
  func.func @transform_2(%arg0: i32, %arg1: i32, %arg2: i32) -> (i32, i32, i32) {
    %c0_i32 = arith.constant 0 : i32
    return %arg2, %arg0, %arg1 : i32, i32, i32
  }
}

</mosaic_0001>

<llo_original>
// kernel: tpu_custom_call.1
$region0: #{tpu_custom_call.1}
  #allocation0 [shape = 'u32[]', space=smem, size = 0x4, offset = 0x4, fixed_abs, tag = 'smem constant byte address 0x4 - core index']
  #allocation1 [shape = 'u32[144,128]{1,0:T(1,128)}', space=vmem, size = 0x12000, scoped, tag = 'internal scratch']
  %s0 = inlined_call_operand.hbm [shape: f32[2,32,256], index: 0, kind: input, shape index: {}]
  %s1 = inlined_call_operand.hbm [shape: f32[1,32,256], index: 1, kind: input, shape index: {}]
  %s2 = inlined_call_operand.hbm [shape: f32[2,32,256], index: 2, kind: output, shape index: {}]
  %s3 = sld [smem:[#allocation0]]
  $region49: #{tpu_custom_call.1} parent=0
    _
  %s5 = ssub.s32 1, %s3
  %s6 = scalar_select 0, %s5, %s3
  $region1: #{tpu_custom_call.1} parent=0
    #allocation2 [shape = 'u8[65536]{0}', space=vmem, size = 0x10000, scoped, tag = 'input window, operand 0']
    #allocation3 [shape = 's32[2]{0}', space=sflag, size = 0x8, scoped, tag = 'scoped memory for tpu_custom_call.1']
    #allocation4 [shape = 's32[2]{0}', space=sflag, size = 0x8, scoped, tag = 'scoped memory for tpu_custom_call.1']
    #allocation5 [shape = 'u8[32768]{0}', space=vmem, size = 0x8000, scoped, tag = 'input window, operand 1, single buffered']
    #allocation6 [shape = 's32[1]{0}', space=sflag, size = 0x4, scoped, tag = 'scoped memory for tpu_custom_call.1']
    #allocation7 [shape = 'u8[65536]{0}', space=vmem, size = 0x10000, scoped, tag = 'output window, operand 0']
    %7 = vsyncpa [#allocation3], 0
    %s8 = scalar_lea.sflag [#allocation3], 1
    %9 = vsyncpa %s8, 0
    %10 = vsyncpa [#allocation6], 0
    %11 = vsyncpa [#allocation4], 0
    %s12 = scalar_lea.sflag [#allocation4], 1
    %13 = vsyncpa %s12, 0
    loop: start=0, step=1, limit=4
    $region2: #{tpu_custom_call.1} parent=1 // loop_pre_header
      _
    $region3: #{tpu_custom_call.1} parent=1 // loop_header
      %s15 = sphi 0, %s19
      %p16 = scmp.ge.s32.totalorder %s15, 4
      %s22 = sphi 0, %s41
      %s23 = sphi 0, %s37
      %s24 = sphi 0, %s33
      %s25 = sphi 0, %s22
      %s26 = sphi 0, %s23
      %s27 = sphi 0, %s24
      %s28 = sphi 0, %s25
      %s29 = sphi 0, %s26
      %s30 = sphi 0, %s27
      %s48 = sphi 0, %s50
      %s51 = sphi 0, %s48
      %s52 = sphi 0, %s51
      %s68 = sphi 0, %s52
      %s76 = sphi 0, %s78
      %s79 = sphi 0, %s76
      %s80 = sphi 0, %s79
      %s96 = sphi 0, %s80
      %s106 = sphi 0, %s108
      %s109 = sphi 0, %s106
      %s110 = sphi 0, %s109
      %s126 = sphi 0, %s110
    $region4: #{tpu_custom_call.1} parent=1 // loop_header_branch
      %18 = sbr.rel (%p16) target = $region8
    $region5: #{tpu_custom_call.1} parent=1 // loop_body
      %s20 = ssub.s32 %s15, 1
      %s21 = ssub.s32 %s15, 2
      %s31 = sadd.s32 1, %s24
      %p32 = scmp.ge.s32.totalorder %s31, 2
      %s33 = scalar_select %p32, 0, %s31
      %s34 = sadd.s32 1, %s23
      %s35 = scalar_select %p32, %s34, %s23
      %p36 = scmp.ge.s32.totalorder %s35, 1
      %s37 = scalar_select %p36, 0, %s35
      %s38 = sadd.s32 1, %s22
      %s39 = scalar_select %p36, %s38, %s22
      %p40 = scmp.ge.s32.totalorder %s39, 1
      %s41 = scalar_select %p40, 0, %s39
      %s42 = ssub.s32 %s24, %s33
      %s43 = ssub.s32 %s22, %s41
      %s44 = sor.u32 %s42, %s43
      %s45 = ssub.s32 %s23, %s37
      %s46 = sor.u32 %s44, %s45
      %p47 = scmp.eq.s32.totalorder %s46, 0
      %s49 = sadd.s32 %s48, 1
      %s50 = scalar_select %p47, %s48, %s49
      %p53 = pneg %p47
      %p54 = scmp.eq.s32.totalorder %s15, 1
      %p55 = por %p53, %p54
      %p56 = scmp.ne.s32.totalorder %s48, %s51
      %p57 = scmp.eq.s32.totalorder %s15, 0
      %p58 = por %p56, %p57
      %p59 = scmp.ne.s32.totalorder %s48, %s51
      %p60 = scmp.eq.s32.totalorder %s20, 1
      %p61 = por %p59, %p60
      %p62 = scmp.ne.s32.totalorder %s51, %s52
      %p63 = scmp.eq.s32.totalorder %s20, 0
      %p64 = por %p62, %p63
      %p65 = scmp.ne.s32.totalorder %s51, %s52
      %p66 = scmp.eq.s32.totalorder %s21, 1
      %p67 = por %p65, %p66
      %p69 = scmp.ne.s32.totalorder %s52, %s68
      %p70 = scmp.eq.s32.totalorder %s21, 0
      %p71 = por %p69, %p70
      %s72 = ssub.s32 %s22, %s41
      %s73 = ssub.s32 %s23, %s37
      %s74 = sor.u32 %s72, %s73
      %p75 = scmp.eq.s32.totalorder %s74, 0
      %s77 = sadd.s32 %s76, 1
      %s78 = scalar_select %p75, %s76, %s77
      %p81 = pneg %p75
      %p82 = scmp.eq.s32.totalorder %s15, 1
      %p83 = por %p81, %p82
      %p84 = scmp.ne.s32.totalorder %s76, %s79
      %p85 = scmp.eq.s32.totalorder %s15, 0
      %p86 = por %p84, %p85
      %p87 = scmp.ne.s32.totalorder %s76, %s79
      %p88 = scmp.eq.s32.totalorder %s20, 1
      %p89 = por %p87, %p88
      %p90 = scmp.ne.s32.totalorder %s79, %s80
      %p91 = scmp.eq.s32.totalorder %s20, 0
      %p92 = por %p90, %p91
      %p93 = scmp.ne.s32.totalorder %s79, %s80
      %p94 = scmp.eq.s32.totalorder %s21, 1
      %p95 = por %p93, %p94
      %p97 = scmp.ne.s32.totalorder %s80, %s96
      %p98 = scmp.eq.s32.totalorder %s21, 0
      %p99 = por %p97, %p98
      %s100 = ssub.s32 %s24, %s33
      %s101 = ssub.s32 %s22, %s41
      %s102 = sor.u32 %s100, %s101
      %s103 = ssub.s32 %s23, %s37
      %s104 = sor.u32 %s102, %s103
      %p105 = scmp.eq.s32.totalorder %s104, 0
      %s107 = sadd.s32 %s106, 1
      %s108 = scalar_select %p105, %s106, %s107
      %p111 = pneg %p105
      %p112 = scmp.eq.s32.totalorder %s15, 1
      %p113 = por %p111, %p112
      %p114 = scmp.ne.s32.totalorder %s106, %s109
      %p115 = scmp.eq.s32.totalorder %s15, 0
      %p116 = por %p114, %p115
      %p117 = scmp.ne.s32.totalorder %s106, %s109
      %p118 = scmp.eq.s32.totalorder %s20, 1
      %p119 = por %p117, %p118
      %p120 = scmp.ne.s32.totalorder %s109, %s110
      %p121 = scmp.eq.s32.totalorder %s20, 0
      %p122 = por %p120, %p121
      %p123 = scmp.ne.s32.totalorder %s109, %s110
      %p124 = scmp.eq.s32.totalorder %s21, 1
      %p125 = por %p123, %p124
      %p127 = scmp.ne.s32.totalorder %s110, %s126
      %p128 = scmp.eq.s32.totalorder %s21, 0
      %p129 = por %p127, %p128
      %p130 = scmp.le.s32.totalorder 1, %s15
      %p131 = scmp.lt.s32.totalorder %s15, 3
      %p132 = pnand %p130, %p131
      %p133 = pneg %p132
      // Predicated region
      $region9: #{tpu_custom_call.1} parent=5 // pred_check
        _
      $region10: #{tpu_custom_call.1} parent=5 // pred_check_branch
        %135 = sbr.rel (%p132) target = $region12
      $region11: #{tpu_custom_call.1} parent=5 // pred_region
        %s136 = ssub.s32 %s15, 1
        // Predicated region
        $region13: #{tpu_custom_call.1} parent=11 // pred_check
          %p137 = pneg %p92
        $region14: #{tpu_custom_call.1} parent=11 // pred_check_branch
          %139 = sbr.rel (%p137) target = $region16
        $region15: #{tpu_custom_call.1} parent=11 // pred_region
          %s140 = smul.u32 4, %s25
          %s141 = smul.u32 2, %s26
          %s143 = ssub.s32 1024, 1024
          %144 = vsyncadd [#allocation6], %s143
          %s145 = smul.addr %s140, 2
          %s146 = sadd.s32 %s141, %s145
          %s147 = smul.addr %s146, 128
          %s148 = scalar_lea.hbm %s1, %s147
          %s149 = sshll.u32 [#allocation5], 4
          %s150 = int_to_ptr.vmem [resolvable:$true] %s149
          %155 = dma.hbm_to_vmem [thread:$0]  %s148, 1024, %s150, [#allocation6], 256, 256, 16
        $region16: #{tpu_custom_call.1} parent=11 // pred_fallthru
          _
      $region12: #{tpu_custom_call.1} parent=5 // pred_fallthru
        _
      %p156 = scmp.lt.s32.totalorder %s15, 2
      // Predicated region
      $region17: #{tpu_custom_call.1} parent=5 // pred_check
        %p157 = pneg %p156
      $region18: #{tpu_custom_call.1} parent=5 // pred_check_branch
        %159 = sbr.rel (%p157) target = $region20
      $region19: #{tpu_custom_call.1} parent=5 // pred_region
        // Predicated region
        $region21: #{tpu_custom_call.1} parent=19 // pred_check
          %p160 = pneg %p58
        $region22: #{tpu_custom_call.1} parent=19 // pred_check_branch
          %162 = sbr.rel (%p160) target = $region24
        $region23: #{tpu_custom_call.1} parent=19 // pred_region
          %s163 = sand.u32 %s48, 1
          %s164 = scalar_lea.sflag [#allocation3], %s163
          %s165 = sand.u32 %s48, 1
          %s166 = smul.addr %s165, 64
          %s167 = scalar_lea.vmem [#allocation2], %s166
          %s168 = smul.u32 4, %s22
          %s169 = smul.u32 2, %s23
          %s171 = ssub.s32 1024, 1024
          %172 = vsyncadd %s164, %s171
          %s173 = smul.addr %s168, 2
          %s174 = sadd.s32 %s169, %s173
          %s175 = smul.addr %s24, 8
          %s176 = sadd.s32 %s174, %s175
          %s177 = smul.addr %s176, 128
          %s178 = scalar_lea.hbm %s0, %s177
          %s179 = sshll.u32 %s167, 4
          %s180 = int_to_ptr.vmem [resolvable:$true] %s179
          %185 = dma.hbm_to_vmem [thread:$0]  %s178, 1024, %s180, %s164, 256, 256, 16
        $region24: #{tpu_custom_call.1} parent=19 // pred_fallthru
          _
      $region20: #{tpu_custom_call.1} parent=5 // pred_fallthru
        _
      %p186 = scmp.le.s32.totalorder 1, %s15
      %p187 = scmp.lt.s32.totalorder %s15, 3
      %p188 = pnand %p186, %p187
      %p189 = pneg %p188
      // Predicated region
      $region25: #{tpu_custom_call.1} parent=5 // pred_check
        _
      $region26: #{tpu_custom_call.1} parent=5 // pred_check_branch
        %191 = sbr.rel (%p188) target = $region28
      $region27: #{tpu_custom_call.1} parent=5 // pred_region
        %s192 = ssub.s32 %s15, 1
        %s193 = sand.u32 %s51, 1
        %s194 = scalar_lea.sflag [#allocation3], %s193
        %s195 = sand.u32 %s51, 1
        %s196 = smul.addr %s195, 64
        %s197 = scalar_lea.vmem [#allocation2], %s196
        // Predicated region
        $region29: #{tpu_custom_call.1} parent=27 // pred_check
          %p198 = pneg %p64
        $region30: #{tpu_custom_call.1} parent=27 // pred_check_branch
          %200 = sbr.rel (%p198) target = $region32
        $region31: #{tpu_custom_call.1} parent=27 // pred_region
          %201 = dma.done %s194, 1024
        $region32: #{tpu_custom_call.1} parent=27 // pred_fallthru
          _
        // Predicated region
        $region33: #{tpu_custom_call.1} parent=27 // pred_check
          %p202 = pneg %p92
        $region34: #{tpu_custom_call.1} parent=27 // pred_check_branch
          %204 = sbr.rel (%p202) target = $region36
        $region35: #{tpu_custom_call.1} parent=27 // pred_region
          %205 = dma.done [#allocation6], 1024
        $region36: #{tpu_custom_call.1} parent=27 // pred_fallthru
          _
        %s206 = sand.u32 %s51, 1
        %s207 = scalar_lea.sflag [#allocation3], %s206
        %s208 = sand.u32 %s51, 1
        %s209 = smul.addr %s208, 64
        %s210 = scalar_lea.vmem [#allocation2], %s209
        %p211 = pneg %p64
        %p212 = pneg %p61
        %p213 = pneg %p92
        %p214 = pneg %p89
        %p215 = pneg %p122
        %p216 = pneg %p119
        %s217 = sand.u32 %s109, 1
        %s218 = scalar_lea.sflag [#allocation4], %s217
        %s219 = sand.u32 %s109, 1
        %s220 = smul.addr %s219, 64
        %s221 = scalar_lea.vmem [#allocation7], %s220
        %s222 = smul.u32 4, %s25
        %s223 = smul.u32 2, %s26
        %s224 = smul.u32 4, %s25
        %s225 = smul.u32 2, %s26
        %s226 = smul.u32 4, %s25
        %s227 = smul.u32 2, %s26
        %v228 = vld [vmem:[%s197] sm:$0xff]
        %v229 = vld [vmem:[%s197 + $0x8] sm:$0xff]
        %v230 = vld [vmem:[%s197 + $0x10] sm:$0xff]
        %v231 = vld [vmem:[%s197 + $0x18] sm:$0xff]
        %v232 = vld [vmem:[%s197 + $0x20] sm:$0xff]
        %v233 = vld [vmem:[%s197 + $0x28] sm:$0xff]
        %v234 = vld [vmem:[%s197 + $0x30] sm:$0xff]
        %v235 = vld [vmem:[%s197 + $0x38] sm:$0xff]
        %v236 = vld [vmem:[#allocation5] sm:$0xff]
        %v237 = vld [vmem:[#allocation5 + $0x8] sm:$0xff]
        %v238 = vld [vmem:[#allocation5 + $0x10] sm:$0xff]
        %v239 = vld [vmem:[#allocation5 + $0x18] sm:$0xff]
        %v240 = vld [vmem:[#allocation5 + $0x20] sm:$0xff]
        %v241 = vld [vmem:[#allocation5 + $0x28] sm:$0xff]
        %v242 = vld [vmem:[#allocation5 + $0x30] sm:$0xff]
        %v243 = vld [vmem:[#allocation5 + $0x38] sm:$0xff]
        %v244 = vadd.f32 %v228, %v236
        %v245 = vadd.f32 %v229, %v237
        %v246 = vadd.f32 %v230, %v238
        %v247 = vadd.f32 %v231, %v239
        %v248 = vadd.f32 %v232, %v240
        %v249 = vadd.f32 %v233, %v241
        %v250 = vadd.f32 %v234, %v242
        %v251 = vadd.f32 %v235, %v243
        %252 = vst [vmem:[%s221] sm:$0xff] %v244
        %253 = vst [vmem:[%s221 + $0x8] sm:$0xff] %v245
        %254 = vst [vmem:[%s221 + $0x10] sm:$0xff] %v246
        %255 = vst [vmem:[%s221 + $0x18] sm:$0xff] %v247
        %256 = vst [vmem:[%s221 + $0x20] sm:$0xff] %v248
        %257 = vst [vmem:[%s221 + $0x28] sm:$0xff] %v249
        %258 = vst [vmem:[%s221 + $0x30] sm:$0xff] %v250
        %259 = vst [vmem:[%s221 + $0x38] sm:$0xff] %v251
        %s260 = sand.u32 %s109, 1
        %s261 = scalar_lea.sflag [#allocation4], %s260
        %s262 = sand.u32 %s109, 1
        %s263 = smul.addr %s262, 64
        %s264 = scalar_lea.vmem [#allocation7], %s263
        // Predicated region
        $region37: #{tpu_custom_call.1} parent=27 // pred_check
          %p265 = pneg %p119
        $region38: #{tpu_custom_call.1} parent=27 // pred_check_branch
          %267 = sbr.rel (%p265) target = $region40
        $region39: #{tpu_custom_call.1} parent=27 // pred_region
          %s268 = smul.u32 4, %s25
          %s269 = smul.u32 2, %s26
          %s271 = ssub.s32 1024, 1024
          %272 = vsyncadd %s261, %s271
          %s273 = smul.addr %s268, 2
          %s274 = sadd.s32 %s269, %s273
          %s275 = smul.addr %s27, 8
          %s276 = sadd.s32 %s274, %s275
          %s277 = smul.addr %s276, 128
          %s278 = scalar_lea.hbm %s2, %s277
          %s279 = sshll.u32 %s264, 4
          %s280 = int_to_ptr.vmem [resolvable:$true] %s279
          %285 = dma.vmem_to_hbm [thread:$0]  %s280, 1024, %s278, %s261, 256, 256, 16
        $region40: #{tpu_custom_call.1} parent=27 // pred_fallthru
          _
      $region28: #{tpu_custom_call.1} parent=5 // pred_fallthru
        _
      %p286 = scmp.le.s32.totalorder 2, %s15
      // Predicated region
      $region41: #{tpu_custom_call.1} parent=5 // pred_check
        %p287 = pneg %p286
      $region42: #{tpu_custom_call.1} parent=5 // pred_check_branch
        %289 = sbr.rel (%p287) target = $region44
      $region43: #{tpu_custom_call.1} parent=5 // pred_region
        %s290 = ssub.s32 %s15, 2
        // Predicated region
        $region45: #{tpu_custom_call.1} parent=43 // pred_check
          %p291 = pneg %p125
        $region46: #{tpu_custom_call.1} parent=43 // pred_check_branch
          %293 = sbr.rel (%p291) target = $region48
        $region47: #{tpu_custom_call.1} parent=43 // pred_region
          %s294 = sand.u32 %s110, 1
          %s295 = scalar_lea.sflag [#allocation4], %s294
          %s296 = sand.u32 %s110, 1
          %s297 = smul.addr %s296, 64
          %s298 = scalar_lea.vmem [#allocation7], %s297
          %299 = dma.done %s295, 1024
        $region48: #{tpu_custom_call.1} parent=43 // pred_fallthru
          _
      $region44: #{tpu_custom_call.1} parent=5 // pred_fallthru
        _
    $region6: #{tpu_custom_call.1} parent=1 // loop_footer
      %s19 = sadd.s32 1, %s15
    $region7: #{tpu_custom_call.1} parent=1 // loop_footer_branch
      %14 = sbr.rel target = $region3
    $region8: #{tpu_custom_call.1} parent=1 // loop_exit
      _
    %300 = vsyncpa [#allocation3], 1
    %s301 = scalar_lea.sflag [#allocation3], 1
    %302 = vsyncpa %s301, 1
    %303 = vsyncpa [#allocation6], 1
    %304 = vsyncpa [#allocation4], 1
    %s305 = scalar_lea.sflag [#allocation4], 1
    %306 = vsyncpa %s305, 1

</llo_original>
